<compile_context>
chip_gen: v7x
topology: tpu7x:2x2x1
jax: 0.10.0
libtpu: 0.0.40
codegen_flags: <defaults>
</compile_context>

<pallas_src>
import jax
import jax.numpy as jnp
from jax.experimental import pallas as pl
from jax.experimental.pallas import tpu as pltpu

LOOKBACK = 8
INPUT_SIZE = 2 * LOOKBACK      # 16
HIDDEN = 32
OUT_FEATURES = 2
LANES = 128                    # TPU lane width; kernel tensors are lane-dense

# ---- parameter-slab row layout (every section start is 8-sublane aligned) ----
W_IH_ROW = 0                   # rows [0, 16)  : W_ih^T    zero-padded to (16, 128)
B_RNN_ROW = 16                 # row  16       : b_ih+b_hh zero-padded to (1, 128)
W_FC_ROW = 24                  # rows [24, 56) : W_fc^T    zero-padded to (32, 128)
B_FC_ROW = 56                  # row  56       : b_fc      zero-padded to (1, 128)
TOTAL_ROWS = 64                # (64, 128) f32 slab = 32 KiB, one input DMA

# ---- single (8, 128) output tile row layout ----
OUT_ROW_LOGITS = 0             # row 0 : FC logits (first OUT_FEATURES lanes valid)
OUT_ROW_HIDDEN = 1             # row 1 : hidden state (first HIDDEN lanes valid)
OUT_ROWS = 8                   # full f32 tile -> one unmasked writeback DMA


def rnn_kernel(x_ref, p_ref, out_ref):
    """Single-timestep Elman cell (h0 == 0) + FC head. One slab in, one tile out."""
    x = x_ref[...]                                            # (1, INPUT_SIZE)

    # Static, zero-cost views into the packed parameter slab.
    w_ih = p_ref[W_IH_ROW:W_IH_ROW + INPUT_SIZE, :]           # (16, 128)
    b_rnn = p_ref[B_RNN_ROW:B_RNN_ROW + 1, :]                 # (1, 128) = b_ih + b_hh
    w_fc = p_ref[W_FC_ROW:W_FC_ROW + HIDDEN, :]               # (32, 128), cols>=2 are 0
    b_fc = p_ref[B_FC_ROW:B_FC_ROW + 1, :]                    # (1, 128)

    # h0 @ W_hh omitted: h0 is always zeros (init_hidden); b_hh folded into b_rnn.
    pre = jnp.dot(x, w_ih, preferred_element_type=jnp.float32) + b_rnn   # (1, 128)
    h1 = jnp.tanh(pre)                         # padded lanes: tanh(0) = 0

    # FC head: contiguous lanes-from-0 slice of h1, K = 32 -> still one MXU pass.
    logits = (jnp.dot(h1[:, :HIDDEN], w_fc, preferred_element_type=jnp.float32)
              + b_fc)                          # (1, 128)

    # Pack both results into one full (8, 128) tile -> a single unmasked store.
    rows = jax.lax.broadcasted_iota(jnp.int32, (OUT_ROWS, LANES), 0)
    out_ref[...] = jnp.where(rows == OUT_ROW_LOGITS, logits,
                             jnp.where(rows == OUT_ROW_HIDDEN, h1, 0.0))


def init_params(key):
    """Deterministic init mirroring PyTorch shapes (weights stored pre-transposed)."""
    k = jax.random.split(key, 6)
    bound = 1.0 / jnp.sqrt(HIDDEN)
    return {
        # W_ih: torch (HIDDEN, INPUT_SIZE) -> stored (INPUT_SIZE, HIDDEN)
        "w_ih": jax.random.uniform(k[0], (INPUT_SIZE, HIDDEN), jnp.float32, -bound, bound),
        "b_ih": jax.random.uniform(k[1], (1, HIDDEN), jnp.float32, -bound, bound),
        # W_hh: torch (HIDDEN, HIDDEN) -> stored transposed (used only by the reference)
        "w_hh": jax.random.uniform(k[2], (HIDDEN, HIDDEN), jnp.float32, -bound, bound),
        "b_hh": jax.random.uniform(k[3], (1, HIDDEN), jnp.float32, -bound, bound),
        # FC: torch (2, HIDDEN) -> stored (HIDDEN, 2)
        "w_fc": jax.random.uniform(k[4], (HIDDEN, OUT_FEATURES), jnp.float32, -bound, bound),
        "b_fc": jax.random.uniform(k[5], (1, OUT_FEATURES), jnp.float32, -bound, bound),
    }


def pack_params(params):
    """One-time fold: biases summed, everything placed into a single lane-dense slab.

    Slab stays f32: keeps the 1e-5 reference tolerance and avoids bf16 VPU casts
    on v5e. (On v6e/v7x a bf16 slab would halve DMA bytes if tolerance allows.)
    """
    slab = jnp.zeros((TOTAL_ROWS, LANES), jnp.float32)
    slab = slab.at[W_IH_ROW:W_IH_ROW + INPUT_SIZE, :HIDDEN].set(params["w_ih"])
    slab = slab.at[B_RNN_ROW, :HIDDEN].set(
        (params["b_ih"] + params["b_hh"]).reshape(HIDDEN))
    slab = slab.at[W_FC_ROW:W_FC_ROW + HIDDEN, :OUT_FEATURES].set(params["w_fc"])
    slab = slab.at[B_FC_ROW, :OUT_FEATURES].set(params["b_fc"].reshape(OUT_FEATURES))
    return slab


@jax.jit
def rnn_forward(x, param_slab):
    """x: (2, LOOKBACK) float32 -> (out (1, 2), hidden (1, 1, HIDDEN))."""
    # Glue matching unsqueeze + Flatten + [None, :] of the torch module.
    x_flat = x.reshape(1, INPUT_SIZE).astype(jnp.float32)

    vmem = pl.BlockSpec(memory_space=pltpu.MemorySpace.VMEM)
    out_tile = pl.pallas_call(
        rnn_kernel,
        out_shape=jax.ShapeDtypeStruct((OUT_ROWS, LANES), jnp.float32),
        in_specs=[vmem, vmem],
        out_specs=vmem,
    )(x_flat, param_slab)

    out = out_tile[OUT_ROW_LOGITS:OUT_ROW_LOGITS + 1, :OUT_FEATURES]       # (1, 2)
    hidden = out_tile[OUT_ROW_HIDDEN:OUT_ROW_HIDDEN + 1, :HIDDEN]
    hidden = hidden.reshape(1, 1, HIDDEN)                                  # (1, 1, 32)
    return out, hidden

# TODO(synk): if this cell is ever driven over many timesteps / batches, move the
# recurrence inside one pallas_call (lax.fori_loop with h carried in VMEM scratch,
# W_hh added back to the slab) or add a batch axis padded to >=8 rows; amortizing
# the slab DMA + launch cost across steps is the dominant remaining win. If the
# hidden state is fed back across successive calls, keep it in its padded (1,128)
# form and alias it with input_output_aliases instead of slicing/reshaping.


def reference_forward(x, params):
    """Pure-JAX reference of the ORIGINAL math (including the h0 @ W_hh term)."""
    x_flat = x.reshape(1, INPUT_SIZE).astype(jnp.float32)
    h0 = jnp.zeros((1, HIDDEN), jnp.float32)
    h1 = jnp.tanh(x_flat @ params["w_ih"] + params["b_ih"]
                  + h0 @ params["w_hh"] + params["b_hh"])
    out = h1 @ params["w_fc"] + params["b_fc"]
    return out, h1.reshape(1, 1, HIDDEN)


if __name__ == "__main__":
    key = jax.random.PRNGKey(0)
    k_param, k_x = jax.random.split(key)
    params = init_params(k_param)
    param_slab = pack_params(params)          # built once, reused every call

    # Input consistent with the module: (2, lookback) history tensor.
    x = jax.random.normal(k_x, (2, LOOKBACK), jnp.float32)

    out, hidden = jax.block_until_ready(rnn_forward(x, param_slab))
    out_ref, hidden_ref = reference_forward(x, params)

    assert out.shape == (1, OUT_FEATURES)
    assert hidden.shape == (1, 1, HIDDEN)
    assert jnp.allclose(out, out_ref, atol=1e-5, rtol=1e-5)
    assert jnp.allclose(hidden, hidden_ref, atol=1e-5, rtol=1e-5)

    print("KERNEL_OK")
</pallas_src>

<mosaic_0001>
module attributes {stable_mosaic.version = 11 : i64} {
  func.func @rnn_kernel(%arg0: memref<1x16xf32, #tpu.memory_space<vmem>>, %arg1: memref<64x128xf32, #tpu.memory_space<vmem>>, %arg2: memref<8x128xf32, #tpu.memory_space<vmem>>) attributes {dimension_semantics = [], scalar_prefetch = 0 : i64, scratch_operands = 0 : i64, tpu.core_type = #tpu.core_type<tc>} {
    %c0 = arith.constant 0 : index
    %c0_0 = arith.constant 0 : index
    %0 = vector.load %arg0[%c0, %c0_0] : memref<1x16xf32, #tpu.memory_space<vmem>>, vector<1x16xf32>
    %c0_1 = arith.constant 0 : index
    %c0_2 = arith.constant 0 : index
    %1 = vector.load %arg1[%c0_1, %c0_2] : memref<64x128xf32, #tpu.memory_space<vmem>>, vector<16x128xf32>
    %c16 = arith.constant 16 : index
    %c0_3 = arith.constant 0 : index
    %2 = vector.load %arg1[%c16, %c0_3] : memref<64x128xf32, #tpu.memory_space<vmem>>, vector<1x128xf32>
    %c24 = arith.constant 24 : index
    %c0_4 = arith.constant 0 : index
    %3 = vector.load %arg1[%c24, %c0_4] : memref<64x128xf32, #tpu.memory_space<vmem>>, vector<32x128xf32>
    %c56 = arith.constant 56 : index
    %c0_5 = arith.constant 0 : index
    %4 = vector.load %arg1[%c56, %c0_5] : memref<64x128xf32, #tpu.memory_space<vmem>>, vector<1x128xf32>
    %cst = arith.constant dense<0.000000e+00> : vector<1x128xf32>
    %5 = tpu.matmul %0, %1, %cst {dimension_numbers = #tpu.dot_dimension_numbers<[1], [0], [0], [1], [0, 0, 1, 1], [], []>} : vector<1x16xf32>, vector<16x128xf32>, vector<1x128xf32> -> vector<1x128xf32>
    %6 = arith.addf %5, %2 : vector<1x128xf32>
    %7 = math.tanh %6 : vector<1x128xf32>
    %8 = vector.extract_strided_slice %7 {offsets = [0, 0], sizes = [1, 32], strides = [1, 1]} : vector<1x128xf32> to vector<1x32xf32>
    %cst_6 = arith.constant dense<0.000000e+00> : vector<1x128xf32>
    %9 = tpu.matmul %8, %3, %cst_6 {dimension_numbers = #tpu.dot_dimension_numbers<[1], [0], [0], [1], [0, 0, 1, 1], [], []>} : vector<1x32xf32>, vector<32x128xf32>, vector<1x128xf32> -> vector<1x128xf32>
    %10 = arith.addf %9, %4 : vector<1x128xf32>
    %11 = tpu.iota {dimensions = array<i32: 0>} : vector<8x128xi32>
    %c0_i32 = arith.constant 0 : i32
    %12 = vector.broadcast %c0_i32 : i32 to vector<8x128xi32>
    %13 = arith.cmpi eq, %11, %12 : vector<8x128xi32>
    %c1_i32 = arith.constant 1 : i32
    %14 = vector.broadcast %c1_i32 : i32 to vector<8x128xi32>
    %15 = arith.cmpi eq, %11, %14 : vector<8x128xi32>
    %cst_7 = arith.constant 0.000000e+00 : f32
    %16 = vector.shape_cast %7 : vector<1x128xf32> to vector<1x128xf32>
    %17 = vector.broadcast %16 : vector<1x128xf32> to vector<8x128xf32>
    %18 = vector.broadcast %cst_7 : f32 to vector<8x128xf32>
    %19 = arith.select %15, %17, %18 : vector<8x128xi1>, vector<8x128xf32>
    %20 = vector.shape_cast %10 : vector<1x128xf32> to vector<1x128xf32>
    %21 = vector.broadcast %20 : vector<1x128xf32> to vector<8x128xf32>
    %22 = arith.select %13, %21, %19 : vector<8x128xi1>, vector<8x128xf32>
    %c0_8 = arith.constant 0 : index
    %c0_9 = arith.constant 0 : index
    %23 = vector.load %arg2[%c0_8, %c0_9] : memref<8x128xf32, #tpu.memory_space<vmem>>, vector<8x128xf32>
    tpu.vector_store %arg2[%c0_8, %c0_9], %22 {strides = array<i32>} : memref<8x128xf32, #tpu.memory_space<vmem>>, vector<8x128xf32>,
    return
  }
}

</mosaic_0001>

<llo_original>
// kernel: rnn_forward.1
$region0: #{rnn_forward.1}
  #allocation0 [shape = 'u32[]', space=smem, size = 0x4, offset = 0x4, fixed_abs, tag = 'smem constant byte address 0x4 - core index']
  #allocation1 [shape = 'u32[144,128]{1,0:T(1,128)}', space=vmem, size = 0x12000, scoped, tag = 'internal scratch']
  %s0 = inlined_call_operand.vmem [shape: f32[1,16], index: 0, kind: input, shape index: {}]
  %s1 = inlined_call_operand.hbm [shape: f32[64,128], index: 1, kind: input, shape index: {}]
  %s2 = inlined_call_operand.vmem [shape: f32[8,128], index: 2, kind: output, shape index: {}]
  %s3 = sld [smem:[#allocation0]]
  $region22: #{rnn_forward.1} parent=0
    _
  %s5 = ssub.s32 1, %s3
  %s6 = scalar_select 0, %s5, %s3
  $region1: #{rnn_forward.1} parent=0
    #allocation2 [shape = 'u8[32768]{0}', space=vmem, size = 0x8000, scoped, tag = 'input window, operand 1, single buffered']
    #allocation3 [shape = 's32[1]{0}', space=sflag, size = 0x4, scoped, tag = 'scoped memory for rnn_forward.1']
    %7 = vsyncpa [#allocation3], 0
    // Predicated region
    $region2: #{rnn_forward.1} parent=1 // pred_check
      _
    $region3: #{rnn_forward.1} parent=1 // pred_check_branch
      %9 = sbr.rel (0) target = $region5
    $region4: #{rnn_forward.1} parent=1 // pred_region
      _
    $region5: #{rnn_forward.1} parent=1 // pred_fallthru
      _
    // Predicated region
    $region6: #{rnn_forward.1} parent=1 // pred_check
      _
    $region7: #{rnn_forward.1} parent=1 // pred_check_branch
      %11 = sbr.rel (0) target = $region9
    $region8: #{rnn_forward.1} parent=1 // pred_region
      %s13 = ssub.s32 1024, 1024
      %14 = vsyncadd [#allocation3], %s13
      %s15 = sshll.u32 [#allocation2], 4
      %s16 = int_to_ptr.vmem [resolvable:$true] %s15
      %21 = dma.hbm_to_vmem [thread:$0]  %s1, 1024, %s16, [#allocation3], 128, 128, 8
    $region9: #{rnn_forward.1} parent=1 // pred_fallthru
      _
    // Predicated region
    $region10: #{rnn_forward.1} parent=1 // pred_check
      _
    $region11: #{rnn_forward.1} parent=1 // pred_check_branch
      %23 = sbr.rel (0) target = $region13
    $region12: #{rnn_forward.1} parent=1 // pred_region
      %24 = dma.done [#allocation3], 1024
    $region13: #{rnn_forward.1} parent=1 // pred_fallthru
      _
    %v25 = vld [vmem:[%s0] sm:$0x1]
    %v26 = vld [vmem:[#allocation2] sm:$0xff]
    %v27 = vld [vmem:[#allocation2 + $0x8] sm:$0xff]
    %v28 = vld [vmem:[#allocation2 + $0x10] sm:$0x1]
    %v29 = vld [vmem:[#allocation2 + $0x18] sm:$0xff]
    %v30 = vld [vmem:[#allocation2 + $0x20] sm:$0xff]
    %v31 = vld [vmem:[#allocation2 + $0x28] sm:$0xff]
    %v32 = vld [vmem:[#allocation2 + $0x30] sm:$0xff]
    %v33 = vld [vmem:[#allocation2 + $0x38] sm:$0x1]
    %vm34 = vcmask 130048
    %v36 = vsel %vm34, %v25, 0
    %38 = vmatprep.subr.mxu0 0.0
    %39 = vmatpush1.msra.mxu0 %v26
    %40 = vmatprep.subr.mxu0 0.0
    %41 = vmatpush1.msra.mxu0 %v27
    %42 = vmatprep.subr.mxu0 0.0
    %43 = vmatpush1.msra.mxu0 0.0
    %44 = vmatprep.subr.mxu0 0.0
    %45 = vmatpush1.msra.mxu0 0.0
    %46 = vmatprep.subr.mxu0 0.0
    %47 = vmatpush1.msra.mxu0 0.0
    %48 = vmatprep.subr.mxu0 0.0
    %49 = vmatpush1.msra.mxu0 0.0
    %50 = vmatprep.subr.mxu0 0.0
    %51 = vmatpush1.msra.mxu0 0.0
    %52 = vmatprep.subr.mxu0 0.0
    %53 = vmatpush1.msra.mxu0 0.0
    %54 = vmatprep.subr.mxu0 0.0
    %55 = vmatpush1.msra.mxu0 0.0
    %56 = vmatprep.subr.mxu0 0.0
    %57 = vmatpush1.msra.mxu0 0.0
    %58 = vmatprep.subr.mxu0 0.0
    %59 = vmatpush1.msra.mxu0 0.0
    %60 = vmatprep.subr.mxu0 0.0
    %61 = vmatpush1.msra.mxu0 0.0
    %62 = vmatprep.subr.mxu0 0.0
    %63 = vmatpush1.msra.mxu0 0.0
    %64 = vmatprep.subr.mxu0 0.0
    %65 = vmatpush1.msra.mxu0 0.0
    %66 = vmatprep.subr.mxu0 0.0
    %67 = vmatpush1.msra.mxu0 0.0
    %68 = vmatprep.subr.mxu0 0.0
    %69 = vmatpush1.msra.mxu0 0.0
    %70 = vmatprep.subr.mxu0 0.0
    %71 = vmatpush1.msra.mxu0 0.0
    %72 = vmatprep.subr.mxu0 0.0
    %73 = vmatpush1.msra.mxu0 0.0
    %74 = vmatprep.subr.mxu0 0.0
    %75 = vmatpush1.msra.mxu0 0.0
    %76 = vmatprep.subr.mxu0 0.0
    %77 = vmatpush1.msra.mxu0 0.0
    %78 = vmatprep.subr.mxu0 0.0
    %79 = vmatpush1.msra.mxu0 0.0
    %80 = vmatprep.subr.mxu0 0.0
    %81 = vmatpush1.msra.mxu0 0.0
    %82 = vmatprep.subr.mxu0 0.0
    %83 = vmatpush1.msra.mxu0 0.0
    %84 = vmatprep.subr.mxu0 0.0
    %85 = vmatpush1.msra.mxu0 0.0
    %86 = vmatprep.subr.mxu0 0.0
    %87 = vmatpush1.msra.mxu0 0.0
    %88 = vmatprep.subr.mxu0 0.0
    %89 = vmatpush1.msra.mxu0 0.0
    %90 = vmatprep.subr.mxu0 0.0
    %91 = vmatpush1.msra.mxu0 0.0
    %92 = vmatprep.subr.mxu0 0.0
    %93 = vmatpush1.msra.mxu0 0.0
    %94 = vmatprep.subr.mxu0 0.0
    %95 = vmatpush1.msra.mxu0 0.0
    %96 = vmatprep.subr.mxu0 0.0
    %97 = vmatpush1.msra.mxu0 0.0
    %98 = vmatprep.subr.mxu0 0.0
    %99 = vmatpush1.msra.mxu0 0.0
    %100 = vmatprep.subr.mxu0 0.0
    %101 = vmatpush1.msra.mxu0 0.0
    %102 = vmatprep.mubr.f32.mxu0 0.0
    %103 = vmatmul.mubr.f32.gmra.mrb[0].mxu0 %v36
    %v104 = vpop.f32.mrb[0].mxu0
    %v105 = vadd.f32 %v28, %v104
    %v106 = vpop.f32.mrb[0].mxu0
    %107 = vdwg.mxu0
    %v108 = vtanh.pop %v105
    %vm109 = vcmask 261120
    %v111 = vsel %vm109, %v108, 0
    %113 = vmatprep.subr.mxu0 0.0
    %114 = vmatpush1.msra.mxu0 %v29
    %115 = vmatprep.subr.mxu0 0.0
    %116 = vmatpush1.msra.mxu0 %v30
    %117 = vmatprep.subr.mxu0 0.0
    %118 = vmatpush1.msra.mxu0 %v31
    %119 = vmatprep.subr.mxu0 0.0
    %120 = vmatpush1.msra.mxu0 %v32
    %121 = vmatprep.subr.mxu0 0.0
    %122 = vmatpush1.msra.mxu0 0.0
    %123 = vmatprep.subr.mxu0 0.0
    %124 = vmatpush1.msra.mxu0 0.0
    %125 = vmatprep.subr.mxu0 0.0
    %126 = vmatpush1.msra.mxu0 0.0
    %127 = vmatprep.subr.mxu0 0.0
    %128 = vmatpush1.msra.mxu0 0.0
    %129 = vmatprep.subr.mxu0 0.0
    %130 = vmatpush1.msra.mxu0 0.0
    %131 = vmatprep.subr.mxu0 0.0
    %132 = vmatpush1.msra.mxu0 0.0
    %133 = vmatprep.subr.mxu0 0.0
    %134 = vmatpush1.msra.mxu0 0.0
    %135 = vmatprep.subr.mxu0 0.0
    %136 = vmatpush1.msra.mxu0 0.0
    %137 = vmatprep.subr.mxu0 0.0
    %138 = vmatpush1.msra.mxu0 0.0
    %139 = vmatprep.subr.mxu0 0.0
    %140 = vmatpush1.msra.mxu0 0.0
    %141 = vmatprep.subr.mxu0 0.0
    %142 = vmatpush1.msra.mxu0 0.0
    %143 = vmatprep.subr.mxu0 0.0
    %144 = vmatpush1.msra.mxu0 0.0
    %145 = vmatprep.subr.mxu0 0.0
    %146 = vmatpush1.msra.mxu0 0.0
    %147 = vmatprep.subr.mxu0 0.0
    %148 = vmatpush1.msra.mxu0 0.0
    %149 = vmatprep.subr.mxu0 0.0
    %150 = vmatpush1.msra.mxu0 0.0
    %151 = vmatprep.subr.mxu0 0.0
    %152 = vmatpush1.msra.mxu0 0.0
    %153 = vmatprep.subr.mxu0 0.0
    %154 = vmatpush1.msra.mxu0 0.0
    %155 = vmatprep.subr.mxu0 0.0
    %156 = vmatpush1.msra.mxu0 0.0
    %157 = vmatprep.subr.mxu0 0.0
    %158 = vmatpush1.msra.mxu0 0.0
    %159 = vmatprep.subr.mxu0 0.0
    %160 = vmatpush1.msra.mxu0 0.0
    %161 = vmatprep.subr.mxu0 0.0
    %162 = vmatpush1.msra.mxu0 0.0
    %163 = vmatprep.subr.mxu0 0.0
    %164 = vmatpush1.msra.mxu0 0.0
    %165 = vmatprep.subr.mxu0 0.0
    %166 = vmatpush1.msra.mxu0 0.0
    %167 = vmatprep.subr.mxu0 0.0
    %168 = vmatpush1.msra.mxu0 0.0
    %169 = vmatprep.subr.mxu0 0.0
    %170 = vmatpush1.msra.mxu0 0.0
    %171 = vmatprep.subr.mxu0 0.0
    %172 = vmatpush1.msra.mxu0 0.0
    %173 = vmatprep.subr.mxu0 0.0
    %174 = vmatpush1.msra.mxu0 0.0
    %175 = vmatprep.subr.mxu0 0.0
    %176 = vmatpush1.msra.mxu0 0.0
    %177 = vmatprep.mubr.f32.mxu0 0.0
    %178 = vmatmul.mubr.f32.gmra.mrb[0].mxu0 %v111
    %v179 = vpop.f32.mrb[0].mxu0
    %v180 = vadd.f32 %v33, %v179
    %v181 = vpop.f32.mrb[0].mxu0
    %182 = vdwg.mxu0
    %v183 = vlaneseq
    %v184 = vshrl.u32 %v183, 7
    %vm185 = vcmp.eq.s32.totalorder %v184, 0
    %vm186 = vcmp.eq.s32.totalorder %v184, 1
    %v187 = vlaneseq
    %v188 = vshrl.u32 %v187, 7
    %v189 = vsub.s32 0, %v188
    %v190 = vrot.slane %v108, %v189
    %v191 = vsel %vm186, %v190, 0.0
    %v192 = vlaneseq
    %v193 = vshrl.u32 %v192, 7
    %v194 = vsub.s32 0, %v193
    %v195 = vrot.slane %v180, %v194
    %v196 = vsel %vm185, %v195, %v191
    %197 = vst [vmem:[%s2] sm:$0xff] %v196
    // Predicated region
    $region14: #{rnn_forward.1} parent=1 // pred_check
      _
    $region15: #{rnn_forward.1} parent=1 // pred_check_branch
      %199 = sbr.rel (0) target = $region17
    $region16: #{rnn_forward.1} parent=1 // pred_region
      _
    $region17: #{rnn_forward.1} parent=1 // pred_fallthru
      _
    // Predicated region
    $region18: #{rnn_forward.1} parent=1 // pred_check
      _
    $region19: #{rnn_forward.1} parent=1 // pred_check_branch
      %201 = sbr.rel (0) target = $region21
    $region20: #{rnn_forward.1} parent=1 // pred_region
      _
    $region21: #{rnn_forward.1} parent=1 // pred_fallthru
      _
    %202 = vsyncpa [#allocation3], 1

</llo_original>
